<compile_context>
chip_gen: v5e
topology: v5e:2x2
jax: 0.10.0
libtpu: 0.0.40
codegen_flags: <defaults>
</compile_context>

<pallas_src>
import jax
import jax.numpy as jnp
from jax import lax
from jax.experimental import pallas as pl
from jax.experimental.pallas import tpu as pltpu

_LANES = 128  # lane-dense width for the fused head and the output slab


def _sudoku_fused_kernel(x_ref, w1_ref, b1_ref, wh_ref, bh_ref, out_ref):
    # x:(TN,Din)  w1:(Din,HID)  b1:(1,HID)  wh:(HID,128)  bh:(1,128)  out:(TN,128)
    h = jnp.dot(x_ref[...], w1_ref[...], preferred_element_type=jnp.float32)
    h = jnp.maximum(h + b1_ref[...], 0.0)                       # ReLU, f32

    # One fused 128-lane head matmul: lane 0 = mask logit, lanes 1..9 = digit logits.
    head = jnp.dot(h, wh_ref[...], preferred_element_type=jnp.float32) + bh_ref[...]

    lane = lax.broadcasted_iota(jnp.int32, head.shape, 1)       # (TN,128)
    digit_mask = jnp.logical_and(lane >= 1, lane <= 9)

    # Softmax restricted to the 9 digit lanes (others -> exp(-inf) = 0).
    masked = jnp.where(digit_mask, head, -jnp.inf)
    m = jnp.max(masked, axis=-1, keepdims=True)
    e = jnp.exp(masked - m)
    sol = e / jnp.sum(e, axis=-1, keepdims=True)                # (TN,128), 0 outside 1..9

    p = jax.nn.sigmoid(head[:, 0:1])                            # (TN,1) masking prob

    # merged: lane 0 = 1 - p, lanes 1..9 = p * softmax(digits), lanes 10..127 = 0.
    out_ref[...] = jnp.where(lane == 0, 1.0 - p, p * sol)


def sudoku_forward(x, params, *, num_tiles=2, use_bf16=False):
    """x: (B, 81, 1, H, W) float32.  Returns merged: (B, 81, 10) float32."""
    w1, b1, ws, bs, wm, bm = params
    B, cells = x.shape[0], x.shape[1]
    din = x.shape[2] * x.shape[3] * x.shape[4]
    hidden = w1.shape[1]
    n = B * cells

    # Pack the two heads into one lane-dense (HID,128) weight / (1,128) bias:
    #   column 0 = mask head, columns 1..9 = digit head, rest zero.
    wh = (jnp.zeros((hidden, _LANES), jnp.float32)
          .at[:, 0:1].set(wm.astype(jnp.float32))
          .at[:, 1:10].set(ws.astype(jnp.float32)))
    bh = (jnp.zeros((1, _LANES), jnp.float32)
          .at[:, 0:1].set(bm.astype(jnp.float32))
          .at[:, 1:10].set(bs.astype(jnp.float32)))

    # Two row-tiles: shards across both v7x TensorCores ("parallel"); on
    # v5e/v6e it is just one extra (cheap) grid step.  Minimal row padding.
    tile_n = max(8, ((pl.cdiv(n, num_tiles) + 7) // 8) * 8)
    n_pad = tile_n * num_tiles

    in_dtype = jnp.bfloat16 if use_bf16 else jnp.float32
    x_flat = x.reshape(n, din).astype(jnp.float32)
    if n_pad != n:
        x_flat = jnp.pad(x_flat, ((0, n_pad - n), (0, 0)))
    x_flat = x_flat.astype(in_dtype)
    w1c = w1.astype(in_dtype)
    b1c = b1.astype(jnp.float32)

    in_bytes = 2 if use_bf16 else 4
    cost = pl.CostEstimate(
        flops=2 * n_pad * (din * hidden + hidden * _LANES),
        transcendentals=10 * n_pad,
        bytes_accessed=(n_pad * din * in_bytes + din * hidden * in_bytes
                        + hidden * 4 + hidden * _LANES * 4 + _LANES * 4
                        + n_pad * _LANES * 4),
    )

    out = pl.pallas_call(
        _sudoku_fused_kernel,
        out_shape=jax.ShapeDtypeStruct((n_pad, _LANES), jnp.float32),
        grid_spec=pltpu.PrefetchScalarGridSpec(
            num_scalar_prefetch=0,
            grid=(num_tiles,),
            in_specs=[
                pl.BlockSpec((tile_n, din), lambda i: (i, 0)),     # x rows
                pl.BlockSpec((din, hidden), lambda i: (0, 0)),     # W1 (constant block)
                pl.BlockSpec((1, hidden), lambda i: (0, 0)),       # b1
                pl.BlockSpec((hidden, _LANES), lambda i: (0, 0)),  # fused heads W
                pl.BlockSpec((1, _LANES), lambda i: (0, 0)),       # fused heads b
            ],
            out_specs=pl.BlockSpec((tile_n, _LANES), lambda i: (i, 0)),
        ),
        compiler_params=pltpu.CompilerParams(
            dimension_semantics=("parallel",)),
        cost_estimate=cost,
    )(x_flat, w1c, b1c, wh, bh)

    # Lane-dense slab -> the real (B, 81, 10) merged tensor.
    return out[:n, :10].reshape(B, cells, 10)


def _reference_forward(x, params):
    """Plain-JAX f32 reference of the same forward semantics (for verification)."""
    w1, b1, ws, bs, wm, bm = params
    B, cells = x.shape[0], x.shape[1]
    din = x.shape[2] * x.shape[3] * x.shape[4]
    xf = x.reshape(B * cells, din).astype(jnp.float32)
    h = jnp.maximum(xf @ w1 + b1, 0.0)
    digit_logits = h @ ws + bs
    mask_logit = h @ wm + bm
    sol = jax.nn.softmax(digit_logits, axis=-1)          # solution_boards
    p = jax.nn.sigmoid(mask_logit)                       # masking_probs
    merged = jnp.concatenate([1.0 - p, p * sol], axis=-1)
    return merged.reshape(B, cells, 10)


if __name__ == "__main__":
    key = jax.random.PRNGKey(0)
    B, CELLS, H, W = 2, 81, 16, 16
    DIN, HID = H * W, 128

    ks = jax.random.split(key, 7)
    x = jax.random.uniform(ks[0], (B, CELLS, 1, H, W), dtype=jnp.float32)

    # Deterministic synthetic parameters (perception MLP + two heads).
    w1 = jax.random.normal(ks[1], (DIN, HID), jnp.float32) / jnp.sqrt(DIN)
    b1 = jax.random.normal(ks[2], (1, HID), jnp.float32) * 0.01
    ws = jax.random.normal(ks[3], (HID, 9), jnp.float32) / jnp.sqrt(HID)
    bs = jax.random.normal(ks[4], (1, 9), jnp.float32) * 0.01
    wm = jax.random.normal(ks[5], (HID, 1), jnp.float32) / jnp.sqrt(HID)
    bm = jax.random.normal(ks[6], (1, 1), jnp.float32) * 0.01
    params = (w1, b1, ws, bs, wm, bm)

    ref = jax.block_until_ready(_reference_forward(x, params))

    # f32 path (matches the PyTorch module's precision).
    merged = jax.block_until_ready(sudoku_forward(x, params))
    assert merged.shape == (B, CELLS, 10), merged.shape
    assert jnp.allclose(merged, ref, rtol=1e-3, atol=1e-3), "f32 mismatch vs reference"

    # bf16 fast path for the two matmuls (v6e/v7x); looser tolerance.
    merged_bf16 = jax.block_until_ready(sudoku_forward(x, params, use_bf16=True))
    assert jnp.allclose(merged_bf16, ref, rtol=3e-2, atol=3e-2), "bf16 mismatch vs reference"

    print("KERNEL_OK")
</pallas_src>

<mosaic_0001>
module attributes {stable_mosaic.version = 11 : i64} {
  func.func @_sudoku_fused_kernel(%arg0: i32, %arg1: memref<88x256xf32, #tpu.memory_space<vmem>>, %arg2: memref<256x128xf32, #tpu.memory_space<vmem>>, %arg3: memref<1x128xf32, #tpu.memory_space<vmem>>, %arg4: memref<128x128xf32, #tpu.memory_space<vmem>>, %arg5: memref<1x128xf32, #tpu.memory_space<vmem>>, %arg6: memref<88x128xf32, #tpu.memory_space<vmem>>) attributes {dimension_semantics = [#tpu.dimension_semantics<parallel>], iteration_bounds = array<i64: 2>, scalar_prefetch = 0 : i64, scratch_operands = 0 : i64, tpu.core_type = #tpu.core_type<tc>, window_params = [{transform_indices = @transform_0, window_bounds = array<i64: 88, 256>}, {pipeline_mode = #tpu.pipeline_mode<synchronous>, transform_indices = @transform_1, window_bounds = array<i64: 256, 128>}, {pipeline_mode = #tpu.pipeline_mode<synchronous>, transform_indices = @transform_2, window_bounds = array<i64: 1, 128>}, {pipeline_mode = #tpu.pipeline_mode<synchronous>, transform_indices = @transform_3, window_bounds = array<i64: 128, 128>}, {pipeline_mode = #tpu.pipeline_mode<synchronous>, transform_indices = @transform_4, window_bounds = array<i64: 1, 128>}, {transform_indices = @transform_5, window_bounds = array<i64: 88, 128>}]} {
    %c0 = arith.constant 0 : index
    %c0_0 = arith.constant 0 : index
    %0 = vector.load %arg1[%c0, %c0_0] : memref<88x256xf32, #tpu.memory_space<vmem>>, vector<88x256xf32>
    %c0_1 = arith.constant 0 : index
    %c0_2 = arith.constant 0 : index
    %1 = vector.load %arg2[%c0_1, %c0_2] : memref<256x128xf32, #tpu.memory_space<vmem>>, vector<256x128xf32>
    %cst = arith.constant dense<0.000000e+00> : vector<88x128xf32>
    %2 = tpu.matmul %0, %1, %cst {dimension_numbers = #tpu.dot_dimension_numbers<[1], [0], [0], [1], [0, 0, 1, 1], [], []>} : vector<88x256xf32>, vector<256x128xf32>, vector<88x128xf32> -> vector<88x128xf32>
    %c0_3 = arith.constant 0 : index
    %c0_4 = arith.constant 0 : index
    %3 = vector.load %arg3[%c0_3, %c0_4] : memref<1x128xf32, #tpu.memory_space<vmem>>, vector<1x128xf32>
    %4 = vector.broadcast %3 : vector<1x128xf32> to vector<88x128xf32>
    %5 = arith.addf %2, %4 : vector<88x128xf32>
    %cst_5 = arith.constant 0.000000e+00 : f32
    %6 = vector.broadcast %cst_5 : f32 to vector<88x128xf32>
    %7 = arith.maximumf %5, %6 : vector<88x128xf32>
    %c0_6 = arith.constant 0 : index
    %c0_7 = arith.constant 0 : index
    %8 = vector.load %arg4[%c0_6, %c0_7] : memref<128x128xf32, #tpu.memory_space<vmem>>, vector<128x128xf32>
    %cst_8 = arith.constant dense<0.000000e+00> : vector<88x128xf32>
    %9 = tpu.matmul %7, %8, %cst_8 {dimension_numbers = #tpu.dot_dimension_numbers<[1], [0], [0], [1], [0, 0, 1, 1], [], []>} : vector<88x128xf32>, vector<128x128xf32>, vector<88x128xf32> -> vector<88x128xf32>
    %c0_9 = arith.constant 0 : index
    %c0_10 = arith.constant 0 : index
    %10 = vector.load %arg5[%c0_9, %c0_10] : memref<1x128xf32, #tpu.memory_space<vmem>>, vector<1x128xf32>
    %11 = vector.broadcast %10 : vector<1x128xf32> to vector<88x128xf32>
    %12 = arith.addf %9, %11 : vector<88x128xf32>
    %13 = tpu.iota {dimensions = array<i32: 1>} : vector<88x128xi32>
    %c1_i32 = arith.constant 1 : i32
    %14 = vector.broadcast %c1_i32 : i32 to vector<88x128xi32>
    %15 = arith.cmpi sge, %13, %14 : vector<88x128xi32>
    %c9_i32 = arith.constant 9 : i32
    %16 = vector.broadcast %c9_i32 : i32 to vector<88x128xi32>
    %17 = arith.cmpi sle, %13, %16 : vector<88x128xi32>
    %18 = arith.andi %15, %17 : vector<88x128xi1>
    %cst_11 = arith.constant 0xFF800000 : f32
    %19 = vector.broadcast %cst_11 : f32 to vector<88x128xf32>
    %20 = arith.select %18, %12, %19 : vector<88x128xi1>, vector<88x128xf32>
    %cst_12 = arith.constant dense<0xFF800000> : vector<88xf32>
    %21 = vector.multi_reduction <maximumf>, %20, %cst_12 [1] : vector<88x128xf32> to vector<88xf32>
    %22 = vector.shape_cast %21 : vector<88xf32> to vector<88x1xf32>
    %23 = vector.broadcast %22 : vector<88x1xf32> to vector<88x128xf32>
    %24 = arith.subf %20, %23 : vector<88x128xf32>
    %25 = math.exp %24 : vector<88x128xf32>
    %cst_13 = arith.constant dense<0.000000e+00> : vector<88xf32>
    %26 = vector.multi_reduction <add>, %25, %cst_13 [1] : vector<88x128xf32> to vector<88xf32>
    %27 = vector.shape_cast %26 : vector<88xf32> to vector<88x1xf32>
    %28 = vector.broadcast %27 : vector<88x1xf32> to vector<88x128xf32>
    %29 = arith.divf %25, %28 : vector<88x128xf32>
    %30 = vector.extract_strided_slice %12 {offsets = [0, 0], sizes = [88, 1], strides = [1, 1]} : vector<88x128xf32> to vector<88x1xf32>
    %31 = arith.negf %30 : vector<88x1xf32>
    %32 = math.exp %31 : vector<88x1xf32>
    %cst_14 = arith.constant 1.000000e+00 : f32
    %33 = vector.broadcast %cst_14 : f32 to vector<88x1xf32>
    %34 = arith.addf %33, %32 : vector<88x1xf32>
    %35 = arith.divf %33, %34 : vector<88x1xf32>
    %c0_i32 = arith.constant 0 : i32
    %36 = vector.broadcast %c0_i32 : i32 to vector<88x128xi32>
    %37 = arith.cmpi eq, %13, %36 : vector<88x128xi32>
    %cst_15 = arith.constant 1.000000e+00 : f32
    %38 = vector.broadcast %cst_15 : f32 to vector<88x1xf32>
    %39 = arith.subf %38, %35 : vector<88x1xf32>
    %40 = vector.broadcast %35 : vector<88x1xf32> to vector<88x128xf32>
    %41 = arith.mulf %40, %29 : vector<88x128xf32>
    %42 = vector.shape_cast %39 : vector<88x1xf32> to vector<88x1xf32>
    %43 = vector.broadcast %42 : vector<88x1xf32> to vector<88x128xf32>
    %44 = arith.select %37, %43, %41 : vector<88x128xi1>, vector<88x128xf32>
    %c0_16 = arith.constant 0 : index
    %c0_17 = arith.constant 0 : index
    %45 = vector.load %arg6[%c0_16, %c0_17] : memref<88x128xf32, #tpu.memory_space<vmem>>, vector<88x128xf32>
    tpu.vector_store %arg6[%c0_16, %c0_17], %44 {strides = array<i32>} : memref<88x128xf32, #tpu.memory_space<vmem>>, vector<88x128xf32>,
    return
  }
  func.func @transform_0(%arg0: i32) -> (i32, i32) {
    %c0_i32 = arith.constant 0 : i32
    %c0_i32_0 = arith.constant 0 : i32
    return %arg0, %c0_i32 : i32, i32
  }
  func.func @transform_1(%arg0: i32) -> (i32, i32) {
    %c0_i32 = arith.constant 0 : i32
    %c0_i32_0 = arith.constant 0 : i32
    %c0_i32_1 = arith.constant 0 : i32
    return %c0_i32, %c0_i32_0 : i32, i32
  }
  func.func @transform_2(%arg0: i32) -> (i32, i32) {
    %c0_i32 = arith.constant 0 : i32
    %c0_i32_0 = arith.constant 0 : i32
    %c0_i32_1 = arith.constant 0 : i32
    return %c0_i32, %c0_i32_0 : i32, i32
  }
  func.func @transform_3(%arg0: i32) -> (i32, i32) {
    %c0_i32 = arith.constant 0 : i32
    %c0_i32_0 = arith.constant 0 : i32
    %c0_i32_1 = arith.constant 0 : i32
    return %c0_i32, %c0_i32_0 : i32, i32
  }
  func.func @transform_4(%arg0: i32) -> (i32, i32) {
    %c0_i32 = arith.constant 0 : i32
    %c0_i32_0 = arith.constant 0 : i32
    %c0_i32_1 = arith.constant 0 : i32
    return %c0_i32, %c0_i32_0 : i32, i32
  }
  func.func @transform_5(%arg0: i32) -> (i32, i32) {
    %c0_i32 = arith.constant 0 : i32
    %c0_i32_0 = arith.constant 0 : i32
    return %arg0, %c0_i32 : i32, i32
  }
}

</mosaic_0001>

<llo_original>
// kernel: tpu_custom_call.1
$region0: #{tpu_custom_call.1}
  #allocation0 [shape = 'u32[]', space=smem, size = 0x4, offset = 0x4, fixed_abs, tag = 'smem constant byte address 0x4 - core index']
  #allocation1 [shape = 'u32[72,128]{1,0:T(1,128)}', space=vmem, size = 0x9000, scoped, tag = 'internal scratch']
  %s0 = inlined_call_operand.hbm [shape: f32[176,256], index: 0, kind: input, shape index: {}]
  %s1 = inlined_call_operand.hbm [shape: f32[256,128], index: 1, kind: input, shape index: {}]
  %s2 = inlined_call_operand.vmem [shape: f32[1,128], index: 2, kind: input, shape index: {}]
  %s3 = inlined_call_operand.hbm [shape: f32[128,128], index: 3, kind: input, shape index: {}]
  %s4 = inlined_call_operand.vmem [shape: f32[1,128], index: 4, kind: input, shape index: {}]
  %s5 = inlined_call_operand.hbm [shape: f32[176,128], index: 5, kind: output, shape index: {}]
  %s6 = sld [smem:[#allocation0]]
  $region65: #{tpu_custom_call.1} parent=0
    _
  %s8 = ssub.s32 1, %s6
  %s9 = scalar_select 0, %s8, %s6
  $region1: #{tpu_custom_call.1} parent=0
    #allocation2 [shape = 'u8[180224]{0}', space=vmem, size = 0x2c000, scoped, tag = 'input window, operand 0']
    #allocation3 [shape = 's32[2]{0}', space=sflag, size = 0x8, scoped, tag = 'scoped memory for tpu_custom_call.1']
    #allocation4 [shape = 's32[2]{0}', space=sflag, size = 0x8, scoped, tag = 'scoped memory for tpu_custom_call.1']
    #allocation5 [shape = 'u8[131072]{0}', space=vmem, size = 0x20000, scoped, tag = 'input window, operand 1, single buffered']
    #allocation6 [shape = 's32[1]{0}', space=sflag, size = 0x4, scoped, tag = 'scoped memory for tpu_custom_call.1']
    #allocation7 [shape = 'u8[65536]{0}', space=vmem, size = 0x10000, scoped, tag = 'input window, operand 3, single buffered']
    #allocation8 [shape = 'u8[90112]{0}', space=vmem, size = 0x16000, scoped, tag = 'output window, operand 0']
    %10 = vsyncpa [#allocation3], 0
    %s11 = scalar_lea.sflag [#allocation3], 1
    %12 = vsyncpa %s11, 0
    %13 = vsyncpa [#allocation6], 0
    %14 = vsyncpa [#allocation4], 0
    %s15 = scalar_lea.sflag [#allocation4], 1
    %16 = vsyncpa %s15, 0
    loop: start=0, step=1, limit=4
    $region2: #{tpu_custom_call.1} parent=1 // loop_pre_header
      _
    $region3: #{tpu_custom_call.1} parent=1 // loop_header
      %s18 = sphi 0, %s22
      %p19 = scmp.ge.s32.totalorder %s18, 4
      %s28 = sphi 0, %s30
      %s31 = sphi 0, %s28
      %s32 = sphi 0, %s31
      %s48 = sphi 0, %s32
      %s52 = sphi 0, %s52
      %s54 = sphi 0, %s52
      %s55 = sphi 0, %s54
      %s69 = sphi 0, %s55
      %s73 = sphi 0, %s73
      %s75 = sphi 0, %s73
      %s76 = sphi 0, %s75
      %s90 = sphi 0, %s76
      %s94 = sphi 0, %s94
      %s96 = sphi 0, %s94
      %s97 = sphi 0, %s96
      %s111 = sphi 0, %s97
      %s115 = sphi 0, %s115
      %s117 = sphi 0, %s115
      %s118 = sphi 0, %s117
      %s132 = sphi 0, %s118
      %s138 = sphi 0, %s140
      %s141 = sphi 0, %s138
      %s142 = sphi 0, %s141
      %s158 = sphi 0, %s142
    $region4: #{tpu_custom_call.1} parent=1 // loop_header_branch
      %21 = sbr.rel (%p19) target = $region8
    $region5: #{tpu_custom_call.1} parent=1 // loop_body
      %s23 = ssub.s32 %s18, 1
      %s24 = ssub.s32 %s18, 2
      %s25 = sadd.s32 %s18, 1
      %s26 = ssub.s32 %s18, %s25
      %p27 = scmp.eq.s32.totalorder %s26, 0
      %s29 = sadd.s32 %s28, 1
      %s30 = scalar_select %p27, %s28, %s29
      %p33 = pneg %p27
      %p34 = scmp.eq.s32.totalorder %s18, 1
      %p35 = por %p33, %p34
      %p36 = scmp.ne.s32.totalorder %s28, %s31
      %p37 = scmp.eq.s32.totalorder %s18, 0
      %p38 = por %p36, %p37
      %p39 = scmp.ne.s32.totalorder %s28, %s31
      %p40 = scmp.eq.s32.totalorder %s23, 1
      %p41 = por %p39, %p40
      %p42 = scmp.ne.s32.totalorder %s31, %s32
      %p43 = scmp.eq.s32.totalorder %s23, 0
      %p44 = por %p42, %p43
      %p45 = scmp.ne.s32.totalorder %s31, %s32
      %p46 = scmp.eq.s32.totalorder %s24, 1
      %p47 = por %p45, %p46
      %p49 = scmp.ne.s32.totalorder %s32, %s48
      %p50 = scmp.eq.s32.totalorder %s24, 0
      %p51 = por %p49, %p50
      %s53 = sadd.s32 %s52, 1
      %p56 = scmp.eq.s32.totalorder %s18, 1
      %p57 = scmp.ne.s32.totalorder %s52, %s54
      %p58 = scmp.eq.s32.totalorder %s18, 0
      %p59 = por %p57, %p58
      %p60 = scmp.ne.s32.totalorder %s52, %s54
      %p61 = scmp.eq.s32.totalorder %s23, 1
      %p62 = por %p60, %p61
      %p63 = scmp.ne.s32.totalorder %s54, %s55
      %p64 = scmp.eq.s32.totalorder %s23, 0
      %p65 = por %p63, %p64
      %p66 = scmp.ne.s32.totalorder %s54, %s55
      %p67 = scmp.eq.s32.totalorder %s24, 1
      %p68 = por %p66, %p67
      %p70 = scmp.ne.s32.totalorder %s55, %s69
      %p71 = scmp.eq.s32.totalorder %s24, 0
      %p72 = por %p70, %p71
      %s74 = sadd.s32 %s73, 1
      %p77 = scmp.eq.s32.totalorder %s18, 1
      %p78 = scmp.ne.s32.totalorder %s73, %s75
      %p79 = scmp.eq.s32.totalorder %s18, 0
      %p80 = por %p78, %p79
      %p81 = scmp.ne.s32.totalorder %s73, %s75
      %p82 = scmp.eq.s32.totalorder %s23, 1
      %p83 = por %p81, %p82
      %p84 = scmp.ne.s32.totalorder %s75, %s76
      %p85 = scmp.eq.s32.totalorder %s23, 0
      %p86 = por %p84, %p85
      %p87 = scmp.ne.s32.totalorder %s75, %s76
      %p88 = scmp.eq.s32.totalorder %s24, 1
      %p89 = por %p87, %p88
      %p91 = scmp.ne.s32.totalorder %s76, %s90
      %p92 = scmp.eq.s32.totalorder %s24, 0
      %p93 = por %p91, %p92
      %s95 = sadd.s32 %s94, 1
      %p98 = scmp.eq.s32.totalorder %s18, 1
      %p99 = scmp.ne.s32.totalorder %s94, %s96
      %p100 = scmp.eq.s32.totalorder %s18, 0
      %p101 = por %p99, %p100
      %p102 = scmp.ne.s32.totalorder %s94, %s96
      %p103 = scmp.eq.s32.totalorder %s23, 1
      %p104 = por %p102, %p103
      %p105 = scmp.ne.s32.totalorder %s96, %s97
      %p106 = scmp.eq.s32.totalorder %s23, 0
      %p107 = por %p105, %p106
      %p108 = scmp.ne.s32.totalorder %s96, %s97
      %p109 = scmp.eq.s32.totalorder %s24, 1
      %p110 = por %p108, %p109
      %p112 = scmp.ne.s32.totalorder %s97, %s111
      %p113 = scmp.eq.s32.totalorder %s24, 0
      %p114 = por %p112, %p113
      %s116 = sadd.s32 %s115, 1
      %p119 = scmp.eq.s32.totalorder %s18, 1
      %p120 = scmp.ne.s32.totalorder %s115, %s117
      %p121 = scmp.eq.s32.totalorder %s18, 0
      %p122 = por %p120, %p121
      %p123 = scmp.ne.s32.totalorder %s115, %s117
      %p124 = scmp.eq.s32.totalorder %s23, 1
      %p125 = por %p123, %p124
      %p126 = scmp.ne.s32.totalorder %s117, %s118
      %p127 = scmp.eq.s32.totalorder %s23, 0
      %p128 = por %p126, %p127
      %p129 = scmp.ne.s32.totalorder %s117, %s118
      %p130 = scmp.eq.s32.totalorder %s24, 1
      %p131 = por %p129, %p130
      %p133 = scmp.ne.s32.totalorder %s118, %s132
      %p134 = scmp.eq.s32.totalorder %s24, 0
      %p135 = por %p133, %p134
      %s136 = ssub.s32 %s18, %s25
      %p137 = scmp.eq.s32.totalorder %s136, 0
      %s139 = sadd.s32 %s138, 1
      %s140 = scalar_select %p137, %s138, %s139
      %p143 = pneg %p137
      %p144 = scmp.eq.s32.totalorder %s18, 1
      %p145 = por %p143, %p144
      %p146 = scmp.ne.s32.totalorder %s138, %s141
      %p147 = scmp.eq.s32.totalorder %s18, 0
      %p148 = por %p146, %p147
      %p149 = scmp.ne.s32.totalorder %s138, %s141
      %p150 = scmp.eq.s32.totalorder %s23, 1
      %p151 = por %p149, %p150
      %p152 = scmp.ne.s32.totalorder %s141, %s142
      %p153 = scmp.eq.s32.totalorder %s23, 0
      %p154 = por %p152, %p153
      %p155 = scmp.ne.s32.totalorder %s141, %s142
      %p156 = scmp.eq.s32.totalorder %s24, 1
      %p157 = por %p155, %p156
      %p159 = scmp.ne.s32.totalorder %s142, %s158
      %p160 = scmp.eq.s32.totalorder %s24, 0
      %p161 = por %p159, %p160
      %p162 = scmp.le.s32.totalorder 1, %s18
      %p163 = scmp.lt.s32.totalorder %s18, 3
      %p164 = pnand %p162, %p163
      %p165 = pneg %p164
      // Predicated region
      $region9: #{tpu_custom_call.1} parent=5 // pred_check
        _
      $region10: #{tpu_custom_call.1} parent=5 // pred_check_branch
        %167 = sbr.rel (%p164) target = $region12
      $region11: #{tpu_custom_call.1} parent=5 // pred_region
        %s168 = ssub.s32 %s18, 1
        // Predicated region
        $region13: #{tpu_custom_call.1} parent=11 // pred_check
          %p169 = pneg %p65
        $region14: #{tpu_custom_call.1} parent=11 // pred_check_branch
          %171 = sbr.rel (%p169) target = $region16
        $region15: #{tpu_custom_call.1} parent=11 // pred_region
          %173 = vsyncadd [#allocation6], 0
          %s174 = sshll.u32 %s1, 4
          %s175 = int_to_ptr.hbm [resolvable:$true] %s174
          %s176 = sshll.u32 [#allocation5], 4
          %s177 = int_to_ptr.vmem [resolvable:$true] %s176
          %182 = dma.hbm_to_vmem [thread:$0]  %s175, 4096, %s177, [#allocation6], 128, 128, 8
        $region16: #{tpu_custom_call.1} parent=11 // pred_fallthru
          _
        // Predicated region
        $region17: #{tpu_custom_call.1} parent=11 // pred_check
          %p183 = pneg %p86
        $region18: #{tpu_custom_call.1} parent=11 // pred_check_branch
          %185 = sbr.rel (%p183) target = $region20
        $region19: #{tpu_custom_call.1} parent=11 // pred_region
          _
        $region20: #{tpu_custom_call.1} parent=11 // pred_fallthru
          _
        // Predicated region
        $region21: #{tpu_custom_call.1} parent=11 // pred_check
          %p186 = pneg %p107
        $region22: #{tpu_custom_call.1} parent=11 // pred_check_branch
          %188 = sbr.rel (%p186) target = $region24
        $region23: #{tpu_custom_call.1} parent=11 // pred_region
          %190 = vsyncadd [#allocation6], 0
          %s191 = sshll.u32 %s3, 4
          %s192 = int_to_ptr.hbm [resolvable:$true] %s191
          %s193 = sshll.u32 [#allocation7], 4
          %s194 = int_to_ptr.vmem [resolvable:$true] %s193
          %199 = dma.hbm_to_vmem [thread:$0]  %s192, 2048, %s194, [#allocation6], 128, 128, 8
        $region24: #{tpu_custom_call.1} parent=11 // pred_fallthru
          _
        // Predicated region
        $region25: #{tpu_custom_call.1} parent=11 // pred_check
          %p200 = pneg %p128
        $region26: #{tpu_custom_call.1} parent=11 // pred_check_branch
          %202 = sbr.rel (%p200) target = $region28
        $region27: #{tpu_custom_call.1} parent=11 // pred_region
          _
        $region28: #{tpu_custom_call.1} parent=11 // pred_fallthru
          _
      $region12: #{tpu_custom_call.1} parent=5 // pred_fallthru
        _
      %p203 = scmp.lt.s32.totalorder %s18, 2
      // Predicated region
      $region29: #{tpu_custom_call.1} parent=5 // pred_check
        %p204 = pneg %p203
      $region30: #{tpu_custom_call.1} parent=5 // pred_check_branch
        %206 = sbr.rel (%p204) target = $region32
      $region31: #{tpu_custom_call.1} parent=5 // pred_region
        // Predicated region
        $region33: #{tpu_custom_call.1} parent=31 // pred_check
          %p207 = pneg %p38
        $region34: #{tpu_custom_call.1} parent=31 // pred_check_branch
          %209 = sbr.rel (%p207) target = $region36
        $region35: #{tpu_custom_call.1} parent=31 // pred_region
          %s210 = sand.u32 %s28, 1
          %s211 = scalar_lea.sflag [#allocation3], %s210
          %s212 = sand.u32 %s28, 1
          %s213 = smul.addr %s212, 176
          %s214 = scalar_lea.vmem [#allocation2], %s213
          %s215 = smul.u32 11, %s18
          %217 = vsyncadd %s211, 0
          %s218 = smul.addr %s215, 2
          %s219 = smul.addr %s218, 8
          %s220 = scalar_lea.hbm %s0, %s219
          %s221 = sshll.u32 %s220, 4
          %s222 = int_to_ptr.hbm [resolvable:$true] %s221
          %s223 = sshll.u32 %s214, 4
          %s224 = int_to_ptr.vmem [resolvable:$true] %s223
          %229 = dma.hbm_to_vmem [thread:$0]  %s222, 2816, %s224, %s211, 256, 256, 16
        $region36: #{tpu_custom_call.1} parent=31 // pred_fallthru
          _
      $region32: #{tpu_custom_call.1} parent=5 // pred_fallthru
        _
      %p230 = scmp.le.s32.totalorder 1, %s18
      %p231 = scmp.lt.s32.totalorder %s18, 3
      %p232 = pnand %p230, %p231
      %p233 = pneg %p232
      // Predicated region
      $region37: #{tpu_custom_call.1} parent=5 // pred_check
        _
      $region38: #{tpu_custom_call.1} parent=5 // pred_check_branch
        %235 = sbr.rel (%p232) target = $region40
      $region39: #{tpu_custom_call.1} parent=5 // pred_region
        %s236 = ssub.s32 %s18, 1
        %s237 = sand.u32 %s31, 1
        %s238 = scalar_lea.sflag [#allocation3], %s237
        %s239 = sand.u32 %s31, 1
        %s240 = smul.addr %s239, 176
        %s241 = scalar_lea.vmem [#allocation2], %s240
        // Predicated region
        $region41: #{tpu_custom_call.1} parent=39 // pred_check
          %p242 = pneg %p44
        $region42: #{tpu_custom_call.1} parent=39 // pred_check_branch
          %244 = sbr.rel (%p242) target = $region44
        $region43: #{tpu_custom_call.1} parent=39 // pred_region
          %246 = dma.done %s238, 2816
        $region44: #{tpu_custom_call.1} parent=39 // pred_fallthru
          _
        // Predicated region
        $region45: #{tpu_custom_call.1} parent=39 // pred_check
          %p247 = pneg %p65
        $region46: #{tpu_custom_call.1} parent=39 // pred_check_branch
          %249 = sbr.rel (%p247) target = $region48
        $region47: #{tpu_custom_call.1} parent=39 // pred_region
          %251 = dma.done [#allocation6], 4096
        $region48: #{tpu_custom_call.1} parent=39 // pred_fallthru
          _
        // Predicated region
        $region49: #{tpu_custom_call.1} parent=39 // pred_check
          %p252 = pneg %p107
        $region50: #{tpu_custom_call.1} parent=39 // pred_check_branch
          %254 = sbr.rel (%p252) target = $region52
        $region51: #{tpu_custom_call.1} parent=39 // pred_region
          %256 = dma.done [#allocation6], 2048
        $region52: #{tpu_custom_call.1} parent=39 // pred_fallthru
          _
        %s257 = sand.u32 %s31, 1
        %s258 = scalar_lea.sflag [#allocation3], %s257
        %s259 = sand.u32 %s31, 1
        %s260 = smul.addr %s259, 176
        %s261 = scalar_lea.vmem [#allocation2], %s260
        %p262 = pneg %p44
        %p263 = pneg %p41
        %p264 = pneg %p65
        %p265 = pneg %p62
        %p266 = pneg %p86
        %p267 = pneg %p83
        %p268 = pneg %p107
        %p269 = pneg %p104
        %p270 = pneg %p128
        %p271 = pneg %p125
        %p272 = pneg %p154
        %p273 = pneg %p151
        %s274 = sand.u32 %s141, 1
        %s275 = scalar_lea.sflag [#allocation4], %s274
        %s276 = sand.u32 %s141, 1
        %s277 = smul.addr %s276, 88
        %s278 = scalar_lea.vmem [#allocation8], %s277
        %s279 = smul.u32 11, %s23
        %s280 = smul.u32 11, %s23
        %v281 = vld [vmem:[%s241] sm:$0xff]
        %v282 = vld [vmem:[%s241 + $0x8] sm:$0xff]
        %v283 = vld [vmem:[%s241 + $0x10] sm:$0xff]
        %v284 = vld [vmem:[%s241 + $0x18] sm:$0xff]
        %v285 = vld [vmem:[%s241 + $0x20] sm:$0xff]
        %v286 = vld [vmem:[%s241 + $0x28] sm:$0xff]
        %v287 = vld [vmem:[%s241 + $0x30] sm:$0xff]
        %v288 = vld [vmem:[%s241 + $0x38] sm:$0xff]
        %v289 = vld [vmem:[%s241 + $0x40] sm:$0xff]
        %v290 = vld [vmem:[%s241 + $0x48] sm:$0xff]
        %v291 = vld [vmem:[%s241 + $0x50] sm:$0xff]
        %v292 = vld [vmem:[%s241 + $0x58] sm:$0xff]
        %v293 = vld [vmem:[%s241 + $0x60] sm:$0xff]
        %v294 = vld [vmem:[%s241 + $0x68] sm:$0xff]
        %v295 = vld [vmem:[%s241 + $0x70] sm:$0xff]
        %v296 = vld [vmem:[%s241 + $0x78] sm:$0xff]
        %v297 = vld [vmem:[%s241 + $0x80] sm:$0xff]
        %v298 = vld [vmem:[%s241 + $0x88] sm:$0xff]
        %v299 = vld [vmem:[%s241 + $0x90] sm:$0xff]
        %v300 = vld [vmem:[%s241 + $0x98] sm:$0xff]
        %v301 = vld [vmem:[%s241 + $0xa0] sm:$0xff]
        %v302 = vld [vmem:[%s241 + $0xa8] sm:$0xff]
        %v303 = vld [vmem:[#allocation5] sm:$0xff]
        %v304 = vld [vmem:[#allocation5 + $0x8] sm:$0xff]
        %v305 = vld [vmem:[#allocation5 + $0x10] sm:$0xff]
        %v306 = vld [vmem:[#allocation5 + $0x18] sm:$0xff]
        %v307 = vld [vmem:[#allocation5 + $0x20] sm:$0xff]
        %v308 = vld [vmem:[#allocation5 + $0x28] sm:$0xff]
        %v309 = vld [vmem:[#allocation5 + $0x30] sm:$0xff]
        %v310 = vld [vmem:[#allocation5 + $0x38] sm:$0xff]
        %v311 = vld [vmem:[#allocation5 + $0x40] sm:$0xff]
        %v312 = vld [vmem:[#allocation5 + $0x48] sm:$0xff]
        %v313 = vld [vmem:[#allocation5 + $0x50] sm:$0xff]
        %v314 = vld [vmem:[#allocation5 + $0x58] sm:$0xff]
        %v315 = vld [vmem:[#allocation5 + $0x60] sm:$0xff]
        %v316 = vld [vmem:[#allocation5 + $0x68] sm:$0xff]
        %v317 = vld [vmem:[#allocation5 + $0x70] sm:$0xff]
        %v318 = vld [vmem:[#allocation5 + $0x78] sm:$0xff]
        %v319 = vld [vmem:[#allocation5 + $0x80] sm:$0xff]
        %v320 = vld [vmem:[#allocation5 + $0x88] sm:$0xff]
        %v321 = vld [vmem:[#allocation5 + $0x90] sm:$0xff]
        %v322 = vld [vmem:[#allocation5 + $0x98] sm:$0xff]
        %v323 = vld [vmem:[#allocation5 + $0xa0] sm:$0xff]
        %v324 = vld [vmem:[#allocation5 + $0xa8] sm:$0xff]
        %v325 = vld [vmem:[#allocation5 + $0xb0] sm:$0xff]
        %v326 = vld [vmem:[#allocation5 + $0xb8] sm:$0xff]
        %v327 = vld [vmem:[#allocation5 + $0xc0] sm:$0xff]
        %v328 = vld [vmem:[#allocation5 + $0xc8] sm:$0xff]
        %v329 = vld [vmem:[#allocation5 + $0xd0] sm:$0xff]
        %v330 = vld [vmem:[#allocation5 + $0xd8] sm:$0xff]
        %v331 = vld [vmem:[#allocation5 + $0xe0] sm:$0xff]
        %v332 = vld [vmem:[#allocation5 + $0xe8] sm:$0xff]
        %v333 = vld [vmem:[#allocation5 + $0xf0] sm:$0xff]
        %v334 = vld [vmem:[#allocation5 + $0xf8] sm:$0xff]
        %v335 = vld [vmem:[%s2] sm:$0x1]
        %v337 = vperm.slane %v335, 0
        %339 = vmatpush.msra.mxu0 %v318
        %340 = vmatpush.msra.mxu0 %v317
        %341 = vmatpush.msra.mxu0 %v316
        %342 = vmatpush.msra.mxu0 %v315
        %343 = vmatpush.msra.mxu0 %v314
        %344 = vmatpush.msra.mxu0 %v313
        %345 = vmatpush.msra.mxu0 %v312
        %346 = vmatpush.msra.mxu0 %v311
        %347 = vmatpush.msra.mxu0 %v310
        %348 = vmatpush.msra.mxu0 %v309
        %349 = vmatpush.msra.mxu0 %v308
        %350 = vmatpush.msra.mxu0 %v307
        %351 = vmatpush.msra.mxu0 %v306
        %352 = vmatpush.msra.mxu0 %v305
        %353 = vmatpush.msra.mxu0 %v304
        %354 = vmatpush.msra.mxu0 %v303
        %355 = vmatmul.f32.gmra.mxu0 %v281
        %v356 = vpop.f32.mrf.mxu0
        %v357 = vadd.f32 %v337, %v356
        %358 = vmatmul.f32.gmra.mxu0 %v283
        %v359 = vpop.f32.mrf.mxu0
        %v360 = vadd.f32 %v337, %v359
        %361 = vmatmul.f32.gmra.mxu0 %v285
        %v362 = vpop.f32.mrf.mxu0
        %v363 = vadd.f32 %v337, %v362
        %364 = vmatmul.f32.gmra.mxu0 %v287
        %v365 = vpop.f32.mrf.mxu0
        %v366 = vadd.f32 %v337, %v365
        %367 = vmatmul.f32.gmra.mxu0 %v289
        %v368 = vpop.f32.mrf.mxu0
        %v369 = vadd.f32 %v337, %v368
        %370 = vmatmul.f32.gmra.mxu0 %v291
        %v371 = vpop.f32.mrf.mxu0
        %v372 = vadd.f32 %v337, %v371
        %373 = vmatmul.f32.gmra.mxu0 %v293
        %v374 = vpop.f32.mrf.mxu0
        %v375 = vadd.f32 %v337, %v374
        %376 = vmatmul.f32.gmra.mxu0 %v295
        %v377 = vpop.f32.mrf.mxu0
        %v378 = vadd.f32 %v337, %v377
        %379 = vmatmul.f32.gmra.mxu0 %v297
        %v380 = vpop.f32.mrf.mxu0
        %v381 = vadd.f32 %v337, %v380
        %382 = vmatmul.f32.gmra.mxu0 %v299
        %v383 = vpop.f32.mrf.mxu0
        %v384 = vadd.f32 %v337, %v383
        %385 = vmatmul.f32.gmra.mxu0 %v301
        %v386 = vpop.f32.mrf.mxu0
        %v387 = vadd.f32 %v337, %v386
        %388 = vdwg.mxu0
        %389 = vmatpush.msra.mxu0 %v334
        %390 = vmatpush.msra.mxu0 %v333
        %391 = vmatpush.msra.mxu0 %v332
        %392 = vmatpush.msra.mxu0 %v331
        %393 = vmatpush.msra.mxu0 %v330
        %394 = vmatpush.msra.mxu0 %v329
        %395 = vmatpush.msra.mxu0 %v328
        %396 = vmatpush.msra.mxu0 %v327
        %397 = vmatpush.msra.mxu0 %v326
        %398 = vmatpush.msra.mxu0 %v325
        %399 = vmatpush.msra.mxu0 %v324
        %400 = vmatpush.msra.mxu0 %v323
        %401 = vmatpush.msra.mxu0 %v322
        %402 = vmatpush.msra.mxu0 %v321
        %403 = vmatpush.msra.mxu0 %v320
        %404 = vmatpush.msra.mxu0 %v319
        %405 = vmatmul.f32.gmra.mxu0 %v282
        %v406 = vpop.f32.mrf.mxu0
        %v407 = vadd.f32 %v357, %v406
        %408 = vmatmul.f32.gmra.mxu0 %v284
        %v409 = vpop.f32.mrf.mxu0
        %v410 = vadd.f32 %v360, %v409
        %411 = vmatmul.f32.gmra.mxu0 %v286
        %v412 = vpop.f32.mrf.mxu0
        %v413 = vadd.f32 %v363, %v412
        %414 = vmatmul.f32.gmra.mxu0 %v288
        %v415 = vpop.f32.mrf.mxu0
        %v416 = vadd.f32 %v366, %v415
        %417 = vmatmul.f32.gmra.mxu0 %v290
        %v418 = vpop.f32.mrf.mxu0
        %v419 = vadd.f32 %v369, %v418
        %420 = vmatmul.f32.gmra.mxu0 %v292
        %v421 = vpop.f32.mrf.mxu0
        %v422 = vadd.f32 %v372, %v421
        %423 = vmatmul.f32.gmra.mxu0 %v294
        %v424 = vpop.f32.mrf.mxu0
        %v425 = vadd.f32 %v375, %v424
        %426 = vmatmul.f32.gmra.mxu0 %v296
        %v427 = vpop.f32.mrf.mxu0
        %v428 = vadd.f32 %v378, %v427
        %429 = vmatmul.f32.gmra.mxu0 %v298
        %v430 = vpop.f32.mrf.mxu0
        %v431 = vadd.f32 %v381, %v430
        %432 = vmatmul.f32.gmra.mxu0 %v300
        %v433 = vpop.f32.mrf.mxu0
        %v434 = vadd.f32 %v384, %v433
        %435 = vmatmul.f32.gmra.mxu0 %v302
        %v436 = vpop.f32.mrf.mxu0
        %v437 = vadd.f32 %v387, %v436
        %438 = vdwg.mxu0
        %v439 = vmax.f32 %v407, 0.0
        %v440 = vmax.f32 %v410, 0.0
        %v441 = vmax.f32 %v413, 0.0
        %v442 = vmax.f32 %v416, 0.0
        %v443 = vmax.f32 %v419, 0.0
        %v444 = vmax.f32 %v422, 0.0
        %v445 = vmax.f32 %v425, 0.0
        %v446 = vmax.f32 %v428, 0.0
        %v447 = vmax.f32 %v431, 0.0
        %v448 = vmax.f32 %v434, 0.0
        %v449 = vmax.f32 %v437, 0.0
        %v450 = vld [vmem:[#allocation7] sm:$0xff]
        %v451 = vld [vmem:[#allocation7 + $0x8] sm:$0xff]
        %v452 = vld [vmem:[#allocation7 + $0x10] sm:$0xff]
        %v453 = vld [vmem:[#allocation7 + $0x18] sm:$0xff]
        %v454 = vld [vmem:[#allocation7 + $0x20] sm:$0xff]
        %v455 = vld [vmem:[#allocation7 + $0x28] sm:$0xff]
        %v456 = vld [vmem:[#allocation7 + $0x30] sm:$0xff]
        %v457 = vld [vmem:[#allocation7 + $0x38] sm:$0xff]
        %v458 = vld [vmem:[#allocation7 + $0x40] sm:$0xff]
        %v459 = vld [vmem:[#allocation7 + $0x48] sm:$0xff]
        %v460 = vld [vmem:[#allocation7 + $0x50] sm:$0xff]
        %v461 = vld [vmem:[#allocation7 + $0x58] sm:$0xff]
        %v462 = vld [vmem:[#allocation7 + $0x60] sm:$0xff]
        %v463 = vld [vmem:[#allocation7 + $0x68] sm:$0xff]
        %v464 = vld [vmem:[#allocation7 + $0x70] sm:$0xff]
        %v465 = vld [vmem:[#allocation7 + $0x78] sm:$0xff]
        %v466 = vld [vmem:[%s4] sm:$0x1]
        %v468 = vperm.slane %v466, 0
        %470 = vmatpush.msra.mxu0 %v465
        %471 = vmatpush.msra.mxu0 %v464
        %472 = vmatpush.msra.mxu0 %v463
        %473 = vmatpush.msra.mxu0 %v462
        %474 = vmatpush.msra.mxu0 %v461
        %475 = vmatpush.msra.mxu0 %v460
        %476 = vmatpush.msra.mxu0 %v459
        %477 = vmatpush.msra.mxu0 %v458
        %478 = vmatpush.msra.mxu0 %v457
        %479 = vmatpush.msra.mxu0 %v456
        %480 = vmatpush.msra.mxu0 %v455
        %481 = vmatpush.msra.mxu0 %v454
        %482 = vmatpush.msra.mxu0 %v453
        %483 = vmatpush.msra.mxu0 %v452
        %484 = vmatpush.msra.mxu0 %v451
        %485 = vmatpush.msra.mxu0 %v450
        %486 = vmatmul.f32.gmra.mxu0 %v439
        %v487 = vpop.f32.mrf.mxu0
        %v488 = vadd.f32 %v468, %v487
        %489 = vmatmul.f32.gmra.mxu0 %v440
        %v490 = vpop.f32.mrf.mxu0
        %v491 = vadd.f32 %v468, %v490
        %492 = vmatmul.f32.gmra.mxu0 %v441
        %v493 = vpop.f32.mrf.mxu0
        %v494 = vadd.f32 %v468, %v493
        %495 = vmatmul.f32.gmra.mxu0 %v442
        %v496 = vpop.f32.mrf.mxu0
        %v497 = vadd.f32 %v468, %v496
        %498 = vmatmul.f32.gmra.mxu0 %v443
        %v499 = vpop.f32.mrf.mxu0
        %v500 = vadd.f32 %v468, %v499
        %501 = vmatmul.f32.gmra.mxu0 %v444
        %v502 = vpop.f32.mrf.mxu0
        %v503 = vadd.f32 %v468, %v502
        %504 = vmatmul.f32.gmra.mxu0 %v445
        %v505 = vpop.f32.mrf.mxu0
        %v506 = vadd.f32 %v468, %v505
        %507 = vmatmul.f32.gmra.mxu0 %v446
        %v508 = vpop.f32.mrf.mxu0
        %v509 = vadd.f32 %v468, %v508
        %510 = vmatmul.f32.gmra.mxu0 %v447
        %v511 = vpop.f32.mrf.mxu0
        %v512 = vadd.f32 %v468, %v511
        %513 = vmatmul.f32.gmra.mxu0 %v448
        %v514 = vpop.f32.mrf.mxu0
        %v515 = vadd.f32 %v468, %v514
        %516 = vmatmul.f32.gmra.mxu0 %v449
        %v517 = vpop.f32.mrf.mxu0
        %v518 = vadd.f32 %v468, %v517
        %519 = vdwg.mxu0
        %v520 = vlaneseq
        %v521 = vand.u32 %v520, 127
        %vm522 = vcmp.ge.s32.totalorder %v521, 1
        %vm523 = vcmp.le.s32.totalorder %v521, 9
        %vm524 = vmand %vm522, %vm523
        %v525 = vsel %vm524, %v488, -inf
        %v526 = vsel %vm524, %v491, -inf
        %v527 = vsel %vm524, %v494, -inf
        %v528 = vsel %vm524, %v497, -inf
        %v529 = vsel %vm524, %v500, -inf
        %v530 = vsel %vm524, %v503, -inf
        %v531 = vsel %vm524, %v506, -inf
        %v532 = vsel %vm524, %v509, -inf
        %v533 = vsel %vm524, %v512, -inf
        %v534 = vsel %vm524, %v515, -inf
        %v535 = vsel %vm524, %v518, -inf
        %536 = vmax.xlane.f32.xlu0 %v525
        %v537 = vpop.xlane.xlu0 %536
        %538 = vmax.xlane.f32.xlu0 %v526
        %v539 = vpop.xlane.xlu0 %538
        %540 = vmax.xlane.f32.xlu0 %v527
        %v541 = vpop.xlane.xlu0 %540
        %542 = vmax.xlane.f32.xlu0 %v528
        %v543 = vpop.xlane.xlu0 %542
        %544 = vmax.xlane.f32.xlu0 %v529
        %v545 = vpop.xlane.xlu0 %544
        %546 = vmax.xlane.f32.xlu0 %v530
        %v547 = vpop.xlane.xlu0 %546
        %548 = vmax.xlane.f32.xlu0 %v531
        %v549 = vpop.xlane.xlu0 %548
        %550 = vmax.xlane.f32.xlu0 %v532
        %v551 = vpop.xlane.xlu0 %550
        %552 = vmax.xlane.f32.xlu0 %v533
        %v553 = vpop.xlane.xlu0 %552
        %554 = vmax.xlane.f32.xlu0 %v534
        %v555 = vpop.xlane.xlu0 %554
        %556 = vmax.xlane.f32.xlu0 %v535
        %v557 = vpop.xlane.xlu0 %556
        %v558 = vsub.f32 %v525, %v537
        %v559 = vsub.f32 %v526, %v539
        %v560 = vsub.f32 %v527, %v541
        %v561 = vsub.f32 %v528, %v543
        %v562 = vsub.f32 %v529, %v545
        %v563 = vsub.f32 %v530, %v547
        %v564 = vsub.f32 %v531, %v549
        %v565 = vsub.f32 %v532, %v551
        %v566 = vsub.f32 %v533, %v553
        %v567 = vsub.f32 %v534, %v555
        %v568 = vsub.f32 %v535, %v557
        %v569 = vmul.f32 %v558, 1.442695
        %v570 = vpow.pop %v569
        %v571 = vmul.f32 %v559, 1.442695
        %v572 = vpow.pop %v571
        %v573 = vmul.f32 %v560, 1.442695
        %v574 = vpow.pop %v573
        %v575 = vmul.f32 %v561, 1.442695
        %v576 = vpow.pop %v575
        %v577 = vmul.f32 %v562, 1.442695
        %v578 = vpow.pop %v577
        %v579 = vmul.f32 %v563, 1.442695
        %v580 = vpow.pop %v579
        %v581 = vmul.f32 %v564, 1.442695
        %v582 = vpow.pop %v581
        %v583 = vmul.f32 %v565, 1.442695
        %v584 = vpow.pop %v583
        %v585 = vmul.f32 %v566, 1.442695
        %v586 = vpow.pop %v585
        %v587 = vmul.f32 %v567, 1.442695
        %v588 = vpow.pop %v587
        %v589 = vmul.f32 %v568, 1.442695
        %v590 = vpow.pop %v589
        %591 = vadd.xlane.f32.xlu0 %v570
        %v592 = vpop.xlane.xlu0 %591
        %593 = vadd.xlane.f32.xlu0 %v572
        %v594 = vpop.xlane.xlu0 %593
        %595 = vadd.xlane.f32.xlu0 %v574
        %v596 = vpop.xlane.xlu0 %595
        %597 = vadd.xlane.f32.xlu0 %v576
        %v598 = vpop.xlane.xlu0 %597
        %599 = vadd.xlane.f32.xlu0 %v578
        %v600 = vpop.xlane.xlu0 %599
        %601 = vadd.xlane.f32.xlu0 %v580
        %v602 = vpop.xlane.xlu0 %601
        %603 = vadd.xlane.f32.xlu0 %v582
        %v604 = vpop.xlane.xlu0 %603
        %605 = vadd.xlane.f32.xlu0 %v584
        %v606 = vpop.xlane.xlu0 %605
        %607 = vadd.xlane.f32.xlu0 %v586
        %v608 = vpop.xlane.xlu0 %607
        %609 = vadd.xlane.f32.xlu0 %v588
        %v610 = vpop.xlane.xlu0 %609
        %611 = vadd.xlane.f32.xlu0 %v590
        %v612 = vpop.xlane.xlu0 %611
        %v613 = vrcp.pop %v592
        %v614 = vmul.f32 %v592, %v613
        %v615 = vsub.f32 1.0, %v614
        %v616 = vmul.f32 %v613, %v615
        %v617 = vadd.f32 %v613, %v616
        %vm618 = vweird.f32 %v592
        %vm619 = vweird.f32 %v613
        %vm620 = vmor %vm618, %vm619
        %v621 = vsel %vm620, %v613, %v617
        %v622 = vand.u32 2147483647, %v592
        %vm623 = vcmp.eq.f32.partialorder %v622, 8.507059e+37
        %v624 = vand.u32 %v592, 2147483648
        %v625 = vor.u32 1.1754944e-38, %v624
        %v626 = vsel %vm623, %v625, %v621
        %v627 = vmul.f32 %v570, %v626
        %v628 = vrcp.pop %v594
        %v629 = vmul.f32 %v594, %v628
        %v630 = vsub.f32 1.0, %v629
        %v631 = vmul.f32 %v628, %v630
        %v632 = vadd.f32 %v628, %v631
        %vm633 = vweird.f32 %v594
        %vm634 = vweird.f32 %v628
        %vm635 = vmor %vm633, %vm634
        %v636 = vsel %vm635, %v628, %v632
        %v637 = vand.u32 2147483647, %v594
        %vm638 = vcmp.eq.f32.partialorder %v637, 8.507059e+37
        %v639 = vand.u32 %v594, 2147483648
        %v640 = vor.u32 1.1754944e-38, %v639
        %v641 = vsel %vm638, %v640, %v636
        %v642 = vmul.f32 %v572, %v641
        %v643 = vrcp.pop %v596
        %v644 = vmul.f32 %v596, %v643
        %v645 = vsub.f32 1.0, %v644
        %v646 = vmul.f32 %v643, %v645
        %v647 = vadd.f32 %v643, %v646
        %vm648 = vweird.f32 %v596
        %vm649 = vweird.f32 %v643
        %vm650 = vmor %vm648, %vm649
        %v651 = vsel %vm650, %v643, %v647
        %v652 = vand.u32 2147483647, %v596
        %vm653 = vcmp.eq.f32.partialorder %v652, 8.507059e+37
        %v654 = vand.u32 %v596, 2147483648
        %v655 = vor.u32 1.1754944e-38, %v654
        %v656 = vsel %vm653, %v655, %v651
        %v657 = vmul.f32 %v574, %v656
        %v658 = vrcp.pop %v598
        %v659 = vmul.f32 %v598, %v658
        %v660 = vsub.f32 1.0, %v659
        %v661 = vmul.f32 %v658, %v660
        %v662 = vadd.f32 %v658, %v661
        %vm663 = vweird.f32 %v598
        %vm664 = vweird.f32 %v658
        %vm665 = vmor %vm663, %vm664
        %v666 = vsel %vm665, %v658, %v662
        %v667 = vand.u32 2147483647, %v598
        %vm668 = vcmp.eq.f32.partialorder %v667, 8.507059e+37
        %v669 = vand.u32 %v598, 2147483648
        %v670 = vor.u32 1.1754944e-38, %v669
        %v671 = vsel %vm668, %v670, %v666
        %v672 = vmul.f32 %v576, %v671
        %v673 = vrcp.pop %v600
        %v674 = vmul.f32 %v600, %v673
        %v675 = vsub.f32 1.0, %v674
        %v676 = vmul.f32 %v673, %v675
        %v677 = vadd.f32 %v673, %v676
        %vm678 = vweird.f32 %v600
        %vm679 = vweird.f32 %v673
        %vm680 = vmor %vm678, %vm679
        %v681 = vsel %vm680, %v673, %v677
        %v682 = vand.u32 2147483647, %v600
        %vm683 = vcmp.eq.f32.partialorder %v682, 8.507059e+37
        %v684 = vand.u32 %v600, 2147483648
        %v685 = vor.u32 1.1754944e-38, %v684
        %v686 = vsel %vm683, %v685, %v681
        %v687 = vmul.f32 %v578, %v686
        %v688 = vrcp.pop %v602
        %v689 = vmul.f32 %v602, %v688
        %v690 = vsub.f32 1.0, %v689
        %v691 = vmul.f32 %v688, %v690
        %v692 = vadd.f32 %v688, %v691
        %vm693 = vweird.f32 %v602
        %vm694 = vweird.f32 %v688
        %vm695 = vmor %vm693, %vm694
        %v696 = vsel %vm695, %v688, %v692
        %v697 = vand.u32 2147483647, %v602
        %vm698 = vcmp.eq.f32.partialorder %v697, 8.507059e+37
        %v699 = vand.u32 %v602, 2147483648
        %v700 = vor.u32 1.1754944e-38, %v699
        %v701 = vsel %vm698, %v700, %v696
        %v702 = vmul.f32 %v580, %v701
        %v703 = vrcp.pop %v604
        %v704 = vmul.f32 %v604, %v703
        %v705 = vsub.f32 1.0, %v704
        %v706 = vmul.f32 %v703, %v705
        %v707 = vadd.f32 %v703, %v706
        %vm708 = vweird.f32 %v604
        %vm709 = vweird.f32 %v703
        %vm710 = vmor %vm708, %vm709
        %v711 = vsel %vm710, %v703, %v707
        %v712 = vand.u32 2147483647, %v604
        %vm713 = vcmp.eq.f32.partialorder %v712, 8.507059e+37
        %v714 = vand.u32 %v604, 2147483648
        %v715 = vor.u32 1.1754944e-38, %v714
        %v716 = vsel %vm713, %v715, %v711
        %v717 = vmul.f32 %v582, %v716
        %v718 = vrcp.pop %v606
        %v719 = vmul.f32 %v606, %v718
        %v720 = vsub.f32 1.0, %v719
        %v721 = vmul.f32 %v718, %v720
        %v722 = vadd.f32 %v718, %v721
        %vm723 = vweird.f32 %v606
        %vm724 = vweird.f32 %v718
        %vm725 = vmor %vm723, %vm724
        %v726 = vsel %vm725, %v718, %v722
        %v727 = vand.u32 2147483647, %v606
        %vm728 = vcmp.eq.f32.partialorder %v727, 8.507059e+37
        %v729 = vand.u32 %v606, 2147483648
        %v730 = vor.u32 1.1754944e-38, %v729
        %v731 = vsel %vm728, %v730, %v726
        %v732 = vmul.f32 %v584, %v731
        %v733 = vrcp.pop %v608
        %v734 = vmul.f32 %v608, %v733
        %v735 = vsub.f32 1.0, %v734
        %v736 = vmul.f32 %v733, %v735
        %v737 = vadd.f32 %v733, %v736
        %vm738 = vweird.f32 %v608
        %vm739 = vweird.f32 %v733
        %vm740 = vmor %vm738, %vm739
        %v741 = vsel %vm740, %v733, %v737
        %v742 = vand.u32 2147483647, %v608
        %vm743 = vcmp.eq.f32.partialorder %v742, 8.507059e+37
        %v744 = vand.u32 %v608, 2147483648
        %v745 = vor.u32 1.1754944e-38, %v744
        %v746 = vsel %vm743, %v745, %v741
        %v747 = vmul.f32 %v586, %v746
        %v748 = vrcp.pop %v610
        %v749 = vmul.f32 %v610, %v748
        %v750 = vsub.f32 1.0, %v749
        %v751 = vmul.f32 %v748, %v750
        %v752 = vadd.f32 %v748, %v751
        %vm753 = vweird.f32 %v610
        %vm754 = vweird.f32 %v748
        %vm755 = vmor %vm753, %vm754
        %v756 = vsel %vm755, %v748, %v752
        %v757 = vand.u32 2147483647, %v610
        %vm758 = vcmp.eq.f32.partialorder %v757, 8.507059e+37
        %v759 = vand.u32 %v610, 2147483648
        %v760 = vor.u32 1.1754944e-38, %v759
        %v761 = vsel %vm758, %v760, %v756
        %v762 = vmul.f32 %v588, %v761
        %v763 = vrcp.pop %v612
        %v764 = vmul.f32 %v612, %v763
        %v765 = vsub.f32 1.0, %v764
        %v766 = vmul.f32 %v763, %v765
        %v767 = vadd.f32 %v763, %v766
        %vm768 = vweird.f32 %v612
        %vm769 = vweird.f32 %v763
        %vm770 = vmor %vm768, %vm769
        %v771 = vsel %vm770, %v763, %v767
        %v772 = vand.u32 2147483647, %v612
        %vm773 = vcmp.eq.f32.partialorder %v772, 8.507059e+37
        %v774 = vand.u32 %v612, 2147483648
        %v775 = vor.u32 1.1754944e-38, %v774
        %v776 = vsel %vm773, %v775, %v771
        %v777 = vmul.f32 %v590, %v776
        %v778 = vxor.u32 %v488, 2147483648
        %v779 = vxor.u32 %v491, 2147483648
        %v780 = vxor.u32 %v494, 2147483648
        %v781 = vxor.u32 %v497, 2147483648
        %v782 = vxor.u32 %v500, 2147483648
        %v783 = vxor.u32 %v503, 2147483648
        %v784 = vxor.u32 %v506, 2147483648
        %v785 = vxor.u32 %v509, 2147483648
        %v786 = vxor.u32 %v512, 2147483648
        %v787 = vxor.u32 %v515, 2147483648
        %v788 = vxor.u32 %v518, 2147483648
        %v789 = vmul.f32 %v778, 1.442695
        %v790 = vpow.pop %v789
        %v791 = vmul.f32 %v779, 1.442695
        %v792 = vpow.pop %v791
        %v793 = vmul.f32 %v780, 1.442695
        %v794 = vpow.pop %v793
        %v795 = vmul.f32 %v781, 1.442695
        %v796 = vpow.pop %v795
        %v797 = vmul.f32 %v782, 1.442695
        %v798 = vpow.pop %v797
        %v799 = vmul.f32 %v783, 1.442695
        %v800 = vpow.pop %v799
        %v801 = vmul.f32 %v784, 1.442695
        %v802 = vpow.pop %v801
        %v803 = vmul.f32 %v785, 1.442695
        %v804 = vpow.pop %v803
        %v805 = vmul.f32 %v786, 1.442695
        %v806 = vpow.pop %v805
        %v807 = vmul.f32 %v787, 1.442695
        %v808 = vpow.pop %v807
        %v809 = vmul.f32 %v788, 1.442695
        %v810 = vpow.pop %v809
        %v811 = vadd.f32 %v790, 1.0
        %v812 = vadd.f32 %v792, 1.0
        %v813 = vadd.f32 %v794, 1.0
        %v814 = vadd.f32 %v796, 1.0
        %v815 = vadd.f32 %v798, 1.0
        %v816 = vadd.f32 %v800, 1.0
        %v817 = vadd.f32 %v802, 1.0
        %v818 = vadd.f32 %v804, 1.0
        %v819 = vadd.f32 %v806, 1.0
        %v820 = vadd.f32 %v808, 1.0
        %v821 = vadd.f32 %v810, 1.0
        %v822 = vrcp.pop %v811
        %v823 = vmul.f32 %v811, %v822
        %v824 = vsub.f32 1.0, %v823
        %v825 = vmul.f32 %v822, %v824
        %v826 = vadd.f32 %v822, %v825
        %vm827 = vweird.f32 %v811
        %vm828 = vweird.f32 %v822
        %vm829 = vmor %vm827, %vm828
        %v830 = vsel %vm829, %v822, %v826
        %v831 = vand.u32 2147483647, %v811
        %vm832 = vcmp.eq.f32.partialorder %v831, 8.507059e+37
        %v833 = vand.u32 %v811, 2147483648
        %v834 = vor.u32 1.1754944e-38, %v833
        %v835 = vsel %vm832, %v834, %v830
        %v836 = vmul.f32 1.0, %v835
        %v837 = vrcp.pop %v812
        %v838 = vmul.f32 %v812, %v837
        %v839 = vsub.f32 1.0, %v838
        %v840 = vmul.f32 %v837, %v839
        %v841 = vadd.f32 %v837, %v840
        %vm842 = vweird.f32 %v812
        %vm843 = vweird.f32 %v837
        %vm844 = vmor %vm842, %vm843
        %v845 = vsel %vm844, %v837, %v841
        %v846 = vand.u32 2147483647, %v812
        %vm847 = vcmp.eq.f32.partialorder %v846, 8.507059e+37
        %v848 = vand.u32 %v812, 2147483648
        %v849 = vor.u32 1.1754944e-38, %v848
        %v850 = vsel %vm847, %v849, %v845
        %v851 = vmul.f32 1.0, %v850
        %v852 = vrcp.pop %v813
        %v853 = vmul.f32 %v813, %v852
        %v854 = vsub.f32 1.0, %v853
        %v855 = vmul.f32 %v852, %v854
        %v856 = vadd.f32 %v852, %v855
        %vm857 = vweird.f32 %v813
        %vm858 = vweird.f32 %v852
        %vm859 = vmor %vm857, %vm858
        %v860 = vsel %vm859, %v852, %v856
        %v861 = vand.u32 2147483647, %v813
        %vm862 = vcmp.eq.f32.partialorder %v861, 8.507059e+37
        %v863 = vand.u32 %v813, 2147483648
        %v864 = vor.u32 1.1754944e-38, %v863
        %v865 = vsel %vm862, %v864, %v860
        %v866 = vmul.f32 1.0, %v865
        %v867 = vrcp.pop %v814
        %v868 = vmul.f32 %v814, %v867
        %v869 = vsub.f32 1.0, %v868
        %v870 = vmul.f32 %v867, %v869
        %v871 = vadd.f32 %v867, %v870
        %vm872 = vweird.f32 %v814
        %vm873 = vweird.f32 %v867
        %vm874 = vmor %vm872, %vm873
        %v875 = vsel %vm874, %v867, %v871
        %v876 = vand.u32 2147483647, %v814
        %vm877 = vcmp.eq.f32.partialorder %v876, 8.507059e+37
        %v878 = vand.u32 %v814, 2147483648
        %v879 = vor.u32 1.1754944e-38, %v878
        %v880 = vsel %vm877, %v879, %v875
        %v881 = vmul.f32 1.0, %v880
        %v882 = vrcp.pop %v815
        %v883 = vmul.f32 %v815, %v882
        %v884 = vsub.f32 1.0, %v883
        %v885 = vmul.f32 %v882, %v884
        %v886 = vadd.f32 %v882, %v885
        %vm887 = vweird.f32 %v815
        %vm888 = vweird.f32 %v882
        %vm889 = vmor %vm887, %vm888
        %v890 = vsel %vm889, %v882, %v886
        %v891 = vand.u32 2147483647, %v815
        %vm892 = vcmp.eq.f32.partialorder %v891, 8.507059e+37
        %v893 = vand.u32 %v815, 2147483648
        %v894 = vor.u32 1.1754944e-38, %v893
        %v895 = vsel %vm892, %v894, %v890
        %v896 = vmul.f32 1.0, %v895
        %v897 = vrcp.pop %v816
        %v898 = vmul.f32 %v816, %v897
        %v899 = vsub.f32 1.0, %v898
        %v900 = vmul.f32 %v897, %v899
        %v901 = vadd.f32 %v897, %v900
        %vm902 = vweird.f32 %v816
        %vm903 = vweird.f32 %v897
        %vm904 = vmor %vm902, %vm903
        %v905 = vsel %vm904, %v897, %v901
        %v906 = vand.u32 2147483647, %v816
        %vm907 = vcmp.eq.f32.partialorder %v906, 8.507059e+37
        %v908 = vand.u32 %v816, 2147483648
        %v909 = vor.u32 1.1754944e-38, %v908
        %v910 = vsel %vm907, %v909, %v905
        %v911 = vmul.f32 1.0, %v910
        %v912 = vrcp.pop %v817
        %v913 = vmul.f32 %v817, %v912
        %v914 = vsub.f32 1.0, %v913
        %v915 = vmul.f32 %v912, %v914
        %v916 = vadd.f32 %v912, %v915
        %vm917 = vweird.f32 %v817
        %vm918 = vweird.f32 %v912
        %vm919 = vmor %vm917, %vm918
        %v920 = vsel %vm919, %v912, %v916
        %v921 = vand.u32 2147483647, %v817
        %vm922 = vcmp.eq.f32.partialorder %v921, 8.507059e+37
        %v923 = vand.u32 %v817, 2147483648
        %v924 = vor.u32 1.1754944e-38, %v923
        %v925 = vsel %vm922, %v924, %v920
        %v926 = vmul.f32 1.0, %v925
        %v927 = vrcp.pop %v818
        %v928 = vmul.f32 %v818, %v927
        %v929 = vsub.f32 1.0, %v928
        %v930 = vmul.f32 %v927, %v929
        %v931 = vadd.f32 %v927, %v930
        %vm932 = vweird.f32 %v818
        %vm933 = vweird.f32 %v927
        %vm934 = vmor %vm932, %vm933
        %v935 = vsel %vm934, %v927, %v931
        %v936 = vand.u32 2147483647, %v818
        %vm937 = vcmp.eq.f32.partialorder %v936, 8.507059e+37
        %v938 = vand.u32 %v818, 2147483648
        %v939 = vor.u32 1.1754944e-38, %v938
        %v940 = vsel %vm937, %v939, %v935
        %v941 = vmul.f32 1.0, %v940
        %v942 = vrcp.pop %v819
        %v943 = vmul.f32 %v819, %v942
        %v944 = vsub.f32 1.0, %v943
        %v945 = vmul.f32 %v942, %v944
        %v946 = vadd.f32 %v942, %v945
        %vm947 = vweird.f32 %v819
        %vm948 = vweird.f32 %v942
        %vm949 = vmor %vm947, %vm948
        %v950 = vsel %vm949, %v942, %v946
        %v951 = vand.u32 2147483647, %v819
        %vm952 = vcmp.eq.f32.partialorder %v951, 8.507059e+37
        %v953 = vand.u32 %v819, 2147483648
        %v954 = vor.u32 1.1754944e-38, %v953
        %v955 = vsel %vm952, %v954, %v950
        %v956 = vmul.f32 1.0, %v955
        %v957 = vrcp.pop %v820
        %v958 = vmul.f32 %v820, %v957
        %v959 = vsub.f32 1.0, %v958
        %v960 = vmul.f32 %v957, %v959
        %v961 = vadd.f32 %v957, %v960
        %vm962 = vweird.f32 %v820
        %vm963 = vweird.f32 %v957
        %vm964 = vmor %vm962, %vm963
        %v965 = vsel %vm964, %v957, %v961
        %v966 = vand.u32 2147483647, %v820
        %vm967 = vcmp.eq.f32.partialorder %v966, 8.507059e+37
        %v968 = vand.u32 %v820, 2147483648
        %v969 = vor.u32 1.1754944e-38, %v968
        %v970 = vsel %vm967, %v969, %v965
        %v971 = vmul.f32 1.0, %v970
        %v972 = vrcp.pop %v821
        %v973 = vmul.f32 %v821, %v972
        %v974 = vsub.f32 1.0, %v973
        %v975 = vmul.f32 %v972, %v974
        %v976 = vadd.f32 %v972, %v975
        %vm977 = vweird.f32 %v821
        %vm978 = vweird.f32 %v972
        %vm979 = vmor %vm977, %vm978
        %v980 = vsel %vm979, %v972, %v976
        %v981 = vand.u32 2147483647, %v821
        %vm982 = vcmp.eq.f32.partialorder %v981, 8.507059e+37
        %v983 = vand.u32 %v821, 2147483648
        %v984 = vor.u32 1.1754944e-38, %v983
        %v985 = vsel %vm982, %v984, %v980
        %v986 = vmul.f32 1.0, %v985
        %vm987 = vcmp.eq.s32.totalorder %v521, 0
        %v988 = vsub.f32 1.0, %v836
        %v989 = vsub.f32 1.0, %v851
        %v990 = vsub.f32 1.0, %v866
        %v991 = vsub.f32 1.0, %v881
        %v992 = vsub.f32 1.0, %v896
        %v993 = vsub.f32 1.0, %v911
        %v994 = vsub.f32 1.0, %v926
        %v995 = vsub.f32 1.0, %v941
        %v996 = vsub.f32 1.0, %v956
        %v997 = vsub.f32 1.0, %v971
        %v998 = vsub.f32 1.0, %v986
        %1000 = vset.pattern.permute.xlu0 0
        %1001 = vperm.xlu0 %1000, %v836
        %v1002 = vpop.permute.xlu0 %1001
        %1005 = vset.pattern.permute.xlu0 0
        %1006 = vperm.xlu0 %1005, %v851
        %v1007 = vpop.permute.xlu0 %1006
        %1010 = vset.pattern.permute.xlu0 0
        %1011 = vperm.xlu0 %1010, %v866
        %v1012 = vpop.permute.xlu0 %1011
        %1015 = vset.pattern.permute.xlu0 0
        %1016 = vperm.xlu0 %1015, %v881
        %v1017 = vpop.permute.xlu0 %1016
        %1020 = vset.pattern.permute.xlu0 0
        %1021 = vperm.xlu0 %1020, %v896
        %v1022 = vpop.permute.xlu0 %1021
        %1025 = vset.pattern.permute.xlu0 0
        %1026 = vperm.xlu0 %1025, %v911
        %v1027 = vpop.permute.xlu0 %1026
        %1030 = vset.pattern.permute.xlu0 0
        %1031 = vperm.xlu0 %1030, %v926
        %v1032 = vpop.permute.xlu0 %1031
        %1035 = vset.pattern.permute.xlu0 0
        %1036 = vperm.xlu0 %1035, %v941
        %v1037 = vpop.permute.xlu0 %1036
        %1040 = vset.pattern.permute.xlu0 0
        %1041 = vperm.xlu0 %1040, %v956
        %v1042 = vpop.permute.xlu0 %1041
        %1045 = vset.pattern.permute.xlu0 0
        %1046 = vperm.xlu0 %1045, %v971
        %v1047 = vpop.permute.xlu0 %1046
        %1050 = vset.pattern.permute.xlu0 0
        %1051 = vperm.xlu0 %1050, %v986
        %v1052 = vpop.permute.xlu0 %1051
        %v1054 = vmul.f32 %v1002, %v627
        %v1055 = vmul.f32 %v1007, %v642
        %v1056 = vmul.f32 %v1012, %v657
        %v1057 = vmul.f32 %v1017, %v672
        %v1058 = vmul.f32 %v1022, %v687
        %v1059 = vmul.f32 %v1027, %v702
        %v1060 = vmul.f32 %v1032, %v717
        %v1061 = vmul.f32 %v1037, %v732
        %v1062 = vmul.f32 %v1042, %v747
        %v1063 = vmul.f32 %v1047, %v762
        %v1064 = vmul.f32 %v1052, %v777
        %1066 = vset.pattern.permute.xlu0 0
        %1067 = vperm.xlu0 %1066, %v988
        %v1068 = vpop.permute.xlu0 %1067
        %1071 = vset.pattern.permute.xlu0 0
        %1072 = vperm.xlu0 %1071, %v989
        %v1073 = vpop.permute.xlu0 %1072
        %1076 = vset.pattern.permute.xlu0 0
        %1077 = vperm.xlu0 %1076, %v990
        %v1078 = vpop.permute.xlu0 %1077
        %1081 = vset.pattern.permute.xlu0 0
        %1082 = vperm.xlu0 %1081, %v991
        %v1083 = vpop.permute.xlu0 %1082
        %1086 = vset.pattern.permute.xlu0 0
        %1087 = vperm.xlu0 %1086, %v992
        %v1088 = vpop.permute.xlu0 %1087
        %1091 = vset.pattern.permute.xlu0 0
        %1092 = vperm.xlu0 %1091, %v993
        %v1093 = vpop.permute.xlu0 %1092
        %1096 = vset.pattern.permute.xlu0 0
        %1097 = vperm.xlu0 %1096, %v994
        %v1098 = vpop.permute.xlu0 %1097
        %1101 = vset.pattern.permute.xlu0 0
        %1102 = vperm.xlu0 %1101, %v995
        %v1103 = vpop.permute.xlu0 %1102
        %1106 = vset.pattern.permute.xlu0 0
        %1107 = vperm.xlu0 %1106, %v996
        %v1108 = vpop.permute.xlu0 %1107
        %1111 = vset.pattern.permute.xlu0 0
        %1112 = vperm.xlu0 %1111, %v997
        %v1113 = vpop.permute.xlu0 %1112
        %1116 = vset.pattern.permute.xlu0 0
        %1117 = vperm.xlu0 %1116, %v998
        %v1118 = vpop.permute.xlu0 %1117
        %v1120 = vsel %vm987, %v1068, %v1054
        %v1121 = vsel %vm987, %v1073, %v1055
        %v1122 = vsel %vm987, %v1078, %v1056
        %v1123 = vsel %vm987, %v1083, %v1057
        %v1124 = vsel %vm987, %v1088, %v1058
        %v1125 = vsel %vm987, %v1093, %v1059
        %v1126 = vsel %vm987, %v1098, %v1060
        %v1127 = vsel %vm987, %v1103, %v1061
        %v1128 = vsel %vm987, %v1108, %v1062
        %v1129 = vsel %vm987, %v1113, %v1063
        %v1130 = vsel %vm987, %v1118, %v1064
        %1131 = vst [vmem:[%s278] sm:$0xff] %v1120
        %1132 = vst [vmem:[%s278 + $0x8] sm:$0xff] %v1121
        %1133 = vst [vmem:[%s278 + $0x10] sm:$0xff] %v1122
        %1134 = vst [vmem:[%s278 + $0x18] sm:$0xff] %v1123
        %1135 = vst [vmem:[%s278 + $0x20] sm:$0xff] %v1124
        %1136 = vst [vmem:[%s278 + $0x28] sm:$0xff] %v1125
        %1137 = vst [vmem:[%s278 + $0x30] sm:$0xff] %v1126
        %1138 = vst [vmem:[%s278 + $0x38] sm:$0xff] %v1127
        %1139 = vst [vmem:[%s278 + $0x40] sm:$0xff] %v1128
        %1140 = vst [vmem:[%s278 + $0x48] sm:$0xff] %v1129
        %1141 = vst [vmem:[%s278 + $0x50] sm:$0xff] %v1130
        %s1142 = sand.u32 %s141, 1
        %s1143 = scalar_lea.sflag [#allocation4], %s1142
        %s1144 = sand.u32 %s141, 1
        %s1145 = smul.addr %s1144, 88
        %s1146 = scalar_lea.vmem [#allocation8], %s1145
        // Predicated region
        $region53: #{tpu_custom_call.1} parent=39 // pred_check
          %p1147 = pneg %p151
        $region54: #{tpu_custom_call.1} parent=39 // pred_check_branch
          %1149 = sbr.rel (%p1147) target = $region56
        $region55: #{tpu_custom_call.1} parent=39 // pred_region
          %s1150 = smul.u32 11, %s23
          %1152 = vsyncadd %s1143, 0
          %s1153 = smul.addr %s1150, 8
          %s1154 = scalar_lea.hbm %s5, %s1153
          %s1155 = sshll.u32 %s1146, 4
          %s1156 = int_to_ptr.vmem [resolvable:$true] %s1155
          %s1157 = sshll.u32 %s1154, 4
          %s1158 = int_to_ptr.hbm [resolvable:$true] %s1157
          %1163 = dma.vmem_to_hbm [thread:$0]  %s1156, 1408, %s1158, %s1143, 128, 128, 8
        $region56: #{tpu_custom_call.1} parent=39 // pred_fallthru
          _
      $region40: #{tpu_custom_call.1} parent=5 // pred_fallthru
        _
      %p1164 = scmp.le.s32.totalorder 2, %s18
      // Predicated region
      $region57: #{tpu_custom_call.1} parent=5 // pred_check
        %p1165 = pneg %p1164
      $region58: #{tpu_custom_call.1} parent=5 // pred_check_branch
        %1167 = sbr.rel (%p1165) target = $region60
      $region59: #{tpu_custom_call.1} parent=5 // pred_region
        %s1168 = ssub.s32 %s18, 2
        // Predicated region
        $region61: #{tpu_custom_call.1} parent=59 // pred_check
          %p1169 = pneg %p157
        $region62: #{tpu_custom_call.1} parent=59 // pred_check_branch
          %1171 = sbr.rel (%p1169) target = $region64
        $region63: #{tpu_custom_call.1} parent=59 // pred_region
          %s1172 = sand.u32 %s142, 1
          %s1173 = scalar_lea.sflag [#allocation4], %s1172
          %s1174 = sand.u32 %s142, 1
          %s1175 = smul.addr %s1174, 88
          %s1176 = scalar_lea.vmem [#allocation8], %s1175
          %1178 = dma.done %s1173, 1408
        $region64: #{tpu_custom_call.1} parent=59 // pred_fallthru
          _
      $region60: #{tpu_custom_call.1} parent=5 // pred_fallthru
        _
    $region6: #{tpu_custom_call.1} parent=1 // loop_footer
      %s22 = sadd.s32 1, %s18
    $region7: #{tpu_custom_call.1} parent=1 // loop_footer_branch
      %17 = sbr.rel target = $region3
    $region8: #{tpu_custom_call.1} parent=1 // loop_exit
      _
    %1179 = vsyncpa [#allocation3], 1
    %s1180 = scalar_lea.sflag [#allocation3], 1
    %1181 = vsyncpa %s1180, 1
    %1182 = vsyncpa [#allocation6], 1
    %1183 = vsyncpa [#allocation4], 1
    %s1184 = scalar_lea.sflag [#allocation4], 1
    %1185 = vsyncpa %s1184, 1

</llo_original>
